<compile_context>
chip_gen: v5e
topology: v5e:2x2
jax: 0.10.0
libtpu: 0.0.40
codegen_flags: <defaults>
</compile_context>

<pallas_src>
import functools

import jax
import jax.numpy as jnp
from jax.experimental import pallas as pl
from jax.experimental.pallas import tpu as pltpu

_LANES = 128
_SUBLANES = 8


def _round_up(x, m):
    return -(-x // m) * m


def _sublane_multiple(dtype):
    # f32 -> 8, bf16 -> 16, int8/bool -> 32 (fully packed vregs).
    return max(_SUBLANES, 32 // max(1, jnp.dtype(dtype).itemsize))


def _dice_sums_kernel(y_ref, l_ref, inter_ref, denom_ref, *, last_rows, last_k):
    """One (batch-block b, reduction-step k) grid step.

    y_ref, l_ref:         (bn, rows_tile, 128) input tiles (any float/int dtype).
    inter_ref, denom_ref: (bn, 8, 128) f32 vreg-partial accumulators, resident
                          across the reduction axis k.
    last_rows/last_k:     static; valid row count of the final (ragged) block.
    """
    k = pl.program_id(1)
    rows_tile = y_ref.shape[1]

    @pl.when(k == 0)
    def _():
        inter_ref[...] = jnp.zeros_like(inter_ref)
        denom_ref[...] = jnp.zeros_like(denom_ref)

    def accumulate(nrows):
        # Static slice of the valid row prefix (nrows is a multiple of 8), so
        # the ragged last block costs neither compute nor masking.
        y = y_ref[:, :nrows, :].astype(jnp.float32)
        lab = l_ref[:, :nrows, :].astype(jnp.float32)
        # Single-EUP sigmoid: sigmoid(x) = 0.5 * tanh(0.5 * x) + 0.5.
        sig = jnp.tanh(y * 0.5) * 0.5 + 0.5

        bn = y.shape[0]
        s = nrows // _SUBLANES
        a = 1
        for cand in range(min(8, s), 1, -1):  # static: most parallel chains
            if s % cand == 0:
                a = cand
                break

        # Two-stage reduction: `a` independent (8,128) accumulator chains,
        # then a short combine -- avoids one long serial VALU dependency chain.
        prod = (sig * lab).reshape(bn, s // a, a * _SUBLANES, _LANES)
        ssum = (sig + lab).reshape(bn, s // a, a * _SUBLANES, _LANES)
        prod = prod.sum(axis=1).reshape(bn, a, _SUBLANES, _LANES).sum(axis=1)
        ssum = ssum.sum(axis=1).reshape(bn, a, _SUBLANES, _LANES).sum(axis=1)

        inter_ref[...] += prod
        denom_ref[...] += ssum

    if last_rows == rows_tile:
        accumulate(rows_tile)
    else:
        @pl.when(k != last_k)
        def _():
            accumulate(rows_tile)

        @pl.when(k == last_k)
        def _():
            accumulate(last_rows)


@functools.partial(jax.jit, static_argnames=("smooth", "max_rows_per_tile"))
def sigmoid_dice_loss(y_s, label_s, smooth=1.0, max_rows_per_tile=None):
    n = y_s.shape[0]
    # Flatten NCHW -> (N, D), same as torch .view(n, -1) (row-major).
    y2 = y_s.reshape(n, -1)
    l2 = label_s.reshape(n, -1)
    d = y2.shape[1]

    sub = max(_sublane_multiple(y2.dtype), _sublane_multiple(l2.dtype))

    # (N, D) -> (N, rows, 128), rows a multiple of 8.  Common case: free
    # reshape, no copy.  Fallback: tiny lane pad (< 1024 elems/sample);
    # logits -> -1e9 so sigmoid(pad) == 0 exactly after the f32 upcast,
    # labels -> 0, keeping every sum exact.
    d_pad = _round_up(d, _SUBLANES * _LANES)
    if d_pad != d:
        y2 = jnp.pad(y2, ((0, 0), (0, d_pad - d)), constant_values=-1e9)
        l2 = jnp.pad(l2, ((0, 0), (0, d_pad - d)), constant_values=0)
    rows = d_pad // _LANES

    y3 = y2.reshape(n, rows, _LANES)
    l3 = l2.reshape(n, rows, _LANES)

    # ~1 MiB per input block (~85% of HBM roofline already) keeps VMEM use low
    # on v7x while amortizing per-step overhead.
    if max_rows_per_tile is None:
        itemsize = max(y3.dtype.itemsize, l3.dtype.itemsize)
        rows_budget = max(sub, (1 << 20) // (_LANES * itemsize))
    else:
        rows_budget = max(sub, int(max_rows_per_tile))

    if rows <= rows_budget:
        # Whole sample fits in one block: no reduction split; pack several
        # samples per grid step so tiny heads aren't pure per-step overhead.
        k_steps = 1
        rows_tile = rows
        bn = max(1, min(n, rows_budget // rows))
        bn = pl.cdiv(n, pl.cdiv(n, bn))  # balance the batch blocks
    else:
        k_steps = pl.cdiv(rows, rows_budget)
        rows_tile = _round_up(pl.cdiv(rows, k_steps), sub)
        k_steps = pl.cdiv(rows, rows_tile)
        bn = 1
    last_rows = rows - (k_steps - 1) * rows_tile  # valid rows in last k block

    nb = pl.cdiv(n, bn)
    grid = (nb, k_steps)

    in_spec = pl.BlockSpec((bn, rows_tile, _LANES), lambda b, k: (b, k, 0))
    acc_spec = pl.BlockSpec((bn, _SUBLANES, _LANES), lambda b, k: (b, 0, 0))

    out_shapes = (
        jax.ShapeDtypeStruct((n, _SUBLANES, _LANES), jnp.float32),  # intersection
        jax.ShapeDtypeStruct((n, _SUBLANES, _LANES), jnp.float32),  # sig + label
    )

    # VMEM budget: 2 inputs x 2 pipeline buffers + ~4 f32 full-tile temporaries
    # + headroom; clamped to stay within v7x's 64 MiB physical VMEM.
    block_in_bytes = bn * rows_tile * _LANES * (y3.dtype.itemsize + l3.dtype.itemsize)
    interm_bytes = 4 * bn * rows_tile * _LANES * 4
    vmem_limit = int(min(64 << 20,
                         max(24 << 20, 2 * block_in_bytes + interm_bytes + (4 << 20))))

    kernel = functools.partial(_dice_sums_kernel,
                               last_rows=last_rows, last_k=k_steps - 1)

    inter_p, denom_p = pl.pallas_call(
        kernel,
        out_shape=out_shapes,
        grid_spec=pltpu.PrefetchScalarGridSpec(
            num_scalar_prefetch=0,
            grid=grid,
            in_specs=[in_spec, in_spec],
            out_specs=[acc_spec, acc_spec],
        ),
        compiler_params=pltpu.CompilerParams(
            dimension_semantics=("parallel", "arbitrary"),
            vmem_limit_bytes=vmem_limit,
        ),
    )(y3, l3)

    # Cheap scalar glue on (N, 8, 128) partials.
    inter = jnp.sum(inter_p, axis=(1, 2))
    denom = jnp.sum(denom_p, axis=(1, 2))
    per_sample = 2.0 * (inter + smooth) / (denom + smooth)
    return 1.0 - per_sample.sum() / n


def _reference(y_s, label_s, smooth=1.0):
    n = y_s.shape[0]
    y = jax.nn.sigmoid(y_s.astype(jnp.float32)).reshape(n, -1)
    lab = label_s.astype(jnp.float32).reshape(n, -1)
    inter = (y * lab).sum(1)
    return 1.0 - (2.0 * (inter + smooth) / (y.sum(1) + lab.sum(1) + smooth)).sum() / n


if __name__ == "__main__":
    key = jax.random.PRNGKey(0)
    k1, k2, k3, k4, k5, k6 = jax.random.split(key, 6)

    # NCHW logits/labels, segmentation-style use of SigmoidDiceLoss.
    x_shape = (2, 4, 16, 16)
    y_f32 = jax.random.normal(k1, x_shape, dtype=jnp.float32)
    lab_f32 = (jax.random.uniform(k2, x_shape) > 0.5).astype(jnp.float32)

    # 1) f32 path, pad-free layout, single grid step (batch-blocked).
    loss32 = jax.block_until_ready(sigmoid_dice_loss(y_f32, lab_f32, smooth=1.0))
    ref32 = _reference(y_f32, lab_f32, smooth=1.0)
    assert jnp.allclose(loss32, ref32, atol=2e-4, rtol=2e-4), (loss32, ref32)

    # 2) bf16 inputs, multi-step reduction with a ragged last block handled by
    #    in-kernel static slicing (rows = 4112 > budget, tile = 2064, rem = 2048).
    big_shape = (1, 514, 1024)
    y_big = jax.random.normal(k3, big_shape, dtype=jnp.float32).astype(jnp.bfloat16)
    lab_big = (jax.random.uniform(k4, big_shape) > 0.5).astype(jnp.bfloat16)
    loss16 = jax.block_until_ready(sigmoid_dice_loss(y_big, lab_big, smooth=1.0))
    ref16 = _reference(y_big.astype(jnp.float32), lab_big.astype(jnp.float32), smooth=1.0)
    assert jnp.allclose(loss16, ref16, atol=2e-4, rtol=2e-4), (loss16, ref16)

    # 3) D not a multiple of 128: exercises the small lane-pad fallback.
    odd_shape = (2, 3, 10, 10)
    y_odd = jax.random.normal(k5, odd_shape, dtype=jnp.float32)
    lab_odd = (jax.random.uniform(k6, odd_shape) > 0.5).astype(jnp.float32)
    loss_odd = jax.block_until_ready(sigmoid_dice_loss(y_odd, lab_odd, smooth=1.0))
    ref_odd = _reference(y_odd, lab_odd, smooth=1.0)
    assert jnp.allclose(loss_odd, ref_odd, atol=2e-4, rtol=2e-4), (loss_odd, ref_odd)

    print("KERNEL_OK")
</pallas_src>

<mosaic_0001>
module attributes {stable_mosaic.version = 11 : i64} {
  func.func @_dice_sums_kernel(%arg0: i32, %arg1: i32, %arg2: memref<2x8x128xf32, #tpu.memory_space<vmem>>, %arg3: memref<2x8x128xf32, #tpu.memory_space<vmem>>, %arg4: memref<2x8x128xf32, #tpu.memory_space<vmem>>, %arg5: memref<2x8x128xf32, #tpu.memory_space<vmem>>) attributes {dimension_semantics = [#tpu.dimension_semantics<parallel>, #tpu.dimension_semantics<arbitrary>], iteration_bounds = array<i64: 1, 1>, scalar_prefetch = 0 : i64, scratch_operands = 0 : i64, tpu.core_type = #tpu.core_type<tc>, window_params = [{transform_indices = @transform_0, window_bounds = array<i64: 2, 8, 128>}, {transform_indices = @transform_1, window_bounds = array<i64: 2, 8, 128>}, {transform_indices = @transform_2, window_bounds = array<i64: 2, 8, 128>}, {transform_indices = @transform_3, window_bounds = array<i64: 2, 8, 128>}]} {
    %c0_i32 = arith.constant 0 : i32
    %0 = arith.cmpi eq, %arg1, %c0_i32 : i32
    %1 = arith.extui %0 : i1 to i32
    %c0_i32_0 = arith.constant 0 : i32
    %2 = arith.cmpi ne, %1, %c0_i32_0 : i32
    scf.if %2 {
      %cst_24 = arith.constant 0.000000e+00 : f32
      %28 = vector.broadcast %cst_24 : f32 to vector<2x8x128xf32>
      %c0_25 = arith.constant 0 : index
      %c0_26 = arith.constant 0 : index
      %c0_27 = arith.constant 0 : index
      %29 = vector.load %arg4[%c0_25, %c0_26, %c0_27] : memref<2x8x128xf32, #tpu.memory_space<vmem>>, vector<2x8x128xf32>
      tpu.vector_store %arg4[%c0_25, %c0_26, %c0_27], %28 {strides = array<i32>} : memref<2x8x128xf32, #tpu.memory_space<vmem>>, vector<2x8x128xf32>,
      %cst_28 = arith.constant 0.000000e+00 : f32
      %30 = vector.broadcast %cst_28 : f32 to vector<2x8x128xf32>
      %c0_29 = arith.constant 0 : index
      %c0_30 = arith.constant 0 : index
      %c0_31 = arith.constant 0 : index
      %31 = vector.load %arg5[%c0_29, %c0_30, %c0_31] : memref<2x8x128xf32, #tpu.memory_space<vmem>>, vector<2x8x128xf32>
      tpu.vector_store %arg5[%c0_29, %c0_30, %c0_31], %30 {strides = array<i32>} : memref<2x8x128xf32, #tpu.memory_space<vmem>>, vector<2x8x128xf32>,
    } else {
    }
    %c0 = arith.constant 0 : index
    %c0_1 = arith.constant 0 : index
    %c0_2 = arith.constant 0 : index
    %3 = vector.load %arg2[%c0, %c0_1, %c0_2] : memref<2x8x128xf32, #tpu.memory_space<vmem>>, vector<2x8x128xf32>
    %c0_3 = arith.constant 0 : index
    %c0_4 = arith.constant 0 : index
    %c0_5 = arith.constant 0 : index
    %4 = vector.load %arg3[%c0_3, %c0_4, %c0_5] : memref<2x8x128xf32, #tpu.memory_space<vmem>>, vector<2x8x128xf32>
    %cst = arith.constant 5.000000e-01 : f32
    %5 = vector.broadcast %cst : f32 to vector<2x8x128xf32>
    %6 = arith.mulf %3, %5 : vector<2x8x128xf32>
    %7 = math.tanh %6 : vector<2x8x128xf32>
    %cst_6 = arith.constant 5.000000e-01 : f32
    %8 = vector.broadcast %cst_6 : f32 to vector<2x8x128xf32>
    %9 = arith.mulf %7, %8 : vector<2x8x128xf32>
    %cst_7 = arith.constant 5.000000e-01 : f32
    %10 = vector.broadcast %cst_7 : f32 to vector<2x8x128xf32>
    %11 = arith.addf %9, %10 : vector<2x8x128xf32>
    %12 = arith.mulf %11, %4 : vector<2x8x128xf32>
    %13 = vector.shape_cast %12 : vector<2x8x128xf32> to vector<2x1x8x128xf32>
    %14 = arith.addf %11, %4 : vector<2x8x128xf32>
    %15 = vector.shape_cast %14 : vector<2x8x128xf32> to vector<2x1x8x128xf32>
    %cst_8 = arith.constant dense<0.000000e+00> : vector<2x8x128xf32>
    %16 = vector.multi_reduction <add>, %13, %cst_8 [1] : vector<2x1x8x128xf32> to vector<2x8x128xf32>
    %17 = vector.shape_cast %16 : vector<2x8x128xf32> to vector<2x1x8x128xf32>
    %cst_9 = arith.constant dense<0.000000e+00> : vector<2x8x128xf32>
    %18 = vector.multi_reduction <add>, %17, %cst_9 [1] : vector<2x1x8x128xf32> to vector<2x8x128xf32>
    %cst_10 = arith.constant dense<0.000000e+00> : vector<2x8x128xf32>
    %19 = vector.multi_reduction <add>, %15, %cst_10 [1] : vector<2x1x8x128xf32> to vector<2x8x128xf32>
    %20 = vector.shape_cast %19 : vector<2x8x128xf32> to vector<2x1x8x128xf32>
    %cst_11 = arith.constant dense<0.000000e+00> : vector<2x8x128xf32>
    %21 = vector.multi_reduction <add>, %20, %cst_11 [1] : vector<2x1x8x128xf32> to vector<2x8x128xf32>
    %c0_12 = arith.constant 0 : index
    %c0_13 = arith.constant 0 : index
    %c0_14 = arith.constant 0 : index
    %22 = vector.load %arg4[%c0_12, %c0_13, %c0_14] : memref<2x8x128xf32, #tpu.memory_space<vmem>>, vector<2x8x128xf32>
    %23 = arith.addf %22, %18 : vector<2x8x128xf32>
    %c0_15 = arith.constant 0 : index
    %c0_16 = arith.constant 0 : index
    %c0_17 = arith.constant 0 : index
    %24 = vector.load %arg4[%c0_15, %c0_16, %c0_17] : memref<2x8x128xf32, #tpu.memory_space<vmem>>, vector<2x8x128xf32>
    tpu.vector_store %arg4[%c0_15, %c0_16, %c0_17], %23 {strides = array<i32>} : memref<2x8x128xf32, #tpu.memory_space<vmem>>, vector<2x8x128xf32>,
    %c0_18 = arith.constant 0 : index
    %c0_19 = arith.constant 0 : index
    %c0_20 = arith.constant 0 : index
    %25 = vector.load %arg5[%c0_18, %c0_19, %c0_20] : memref<2x8x128xf32, #tpu.memory_space<vmem>>, vector<2x8x128xf32>
    %26 = arith.addf %25, %21 : vector<2x8x128xf32>
    %c0_21 = arith.constant 0 : index
    %c0_22 = arith.constant 0 : index
    %c0_23 = arith.constant 0 : index
    %27 = vector.load %arg5[%c0_21, %c0_22, %c0_23] : memref<2x8x128xf32, #tpu.memory_space<vmem>>, vector<2x8x128xf32>
    tpu.vector_store %arg5[%c0_21, %c0_22, %c0_23], %26 {strides = array<i32>} : memref<2x8x128xf32, #tpu.memory_space<vmem>>, vector<2x8x128xf32>,
    return
  }
  func.func @transform_0(%arg0: i32, %arg1: i32) -> (i32, i32, i32) {
    %c0_i32 = arith.constant 0 : i32
    %c0_i32_0 = arith.constant 0 : i32
    return %arg0, %arg1, %c0_i32 : i32, i32, i32
  }
  func.func @transform_1(%arg0: i32, %arg1: i32) -> (i32, i32, i32) {
    %c0_i32 = arith.constant 0 : i32
    %c0_i32_0 = arith.constant 0 : i32
    return %arg0, %arg1, %c0_i32 : i32, i32, i32
  }
  func.func @transform_2(%arg0: i32, %arg1: i32) -> (i32, i32, i32) {
    %c0_i32 = arith.constant 0 : i32
    %c0_i32_0 = arith.constant 0 : i32
    %c0_i32_1 = arith.constant 0 : i32
    return %arg0, %c0_i32, %c0_i32_0 : i32, i32, i32
  }
  func.func @transform_3(%arg0: i32, %arg1: i32) -> (i32, i32, i32) {
    %c0_i32 = arith.constant 0 : i32
    %c0_i32_0 = arith.constant 0 : i32
    %c0_i32_1 = arith.constant 0 : i32
    return %arg0, %c0_i32, %c0_i32_0 : i32, i32, i32
  }
}

</mosaic_0001>

<llo_original>
// kernel: sigmoid_dice_loss.1
$region0: #{sigmoid_dice_loss.1}
  #allocation0 [shape = 'u32[]', space=smem, size = 0x4, offset = 0x4, fixed_abs, tag = 'smem constant byte address 0x4 - core index']
  #allocation1 [shape = 'u32[72,128]{1,0:T(1,128)}', space=vmem, size = 0x9000, scoped, tag = 'internal scratch']
  %s0 = inlined_call_operand.vmem [shape: f32[2,8,128], index: 0, kind: input, shape index: {}]
  %s1 = inlined_call_operand.vmem [shape: f32[2,8,128], index: 1, kind: input, shape index: {}]
  %s2 = inlined_call_operand.vmem [shape: f32[2,8,128], index: 2, kind: output, shape index: {0}]
  %s3 = inlined_call_operand.vmem [shape: f32[2,8,128], index: 3, kind: output, shape index: {1}]
  %4 = xla_tuple %s2, %s3
  %s5 = sld [smem:[#allocation0]]
  $region30: #{sigmoid_dice_loss.1} parent=0
    _
  %s7 = ssub.s32 1, %s5
  %s8 = scalar_select 0, %s7, %s5
  // Predicated region
  $region2: #{sigmoid_dice_loss.1} parent=0 // pred_check
    _
  $region3: #{sigmoid_dice_loss.1} parent=0 // pred_check_branch
    %10 = sbr.rel (0) target = $region5
  $region4: #{sigmoid_dice_loss.1} parent=0 // pred_region
    _
  $region5: #{sigmoid_dice_loss.1} parent=0 // pred_fallthru
    _
  // Predicated region
  $region6: #{sigmoid_dice_loss.1} parent=0 // pred_check
    _
  $region7: #{sigmoid_dice_loss.1} parent=0 // pred_check_branch
    %12 = sbr.rel (0) target = $region9
  $region8: #{sigmoid_dice_loss.1} parent=0 // pred_region
    _
  $region9: #{sigmoid_dice_loss.1} parent=0 // pred_fallthru
    _
  %p13 = scmp.eq.s32.totalorder 0, 0
  // Predicated region
  $region10: #{sigmoid_dice_loss.1} parent=0 // pred_check
    %p14 = pneg %p13
  $region11: #{sigmoid_dice_loss.1} parent=0 // pred_check_branch
    %16 = sbr.rel (%p14) target = $region13
  $region12: #{sigmoid_dice_loss.1} parent=0 // pred_region
    %17 = vst [vmem:[%s2] sm:$0xff] 0.0
    %18 = vst [vmem:[%s2 + $0x8] sm:$0xff] 0.0
    %19 = vst [vmem:[%s3] sm:$0xff] 0.0
    %20 = vst [vmem:[%s3 + $0x8] sm:$0xff] 0.0
  $region13: #{sigmoid_dice_loss.1} parent=0 // pred_fallthru
    _
  %v21 = vld [vmem:[%s0] sm:$0xff]
  %v22 = vld [vmem:[%s0 + $0x8] sm:$0xff]
  %v23 = vld [vmem:[%s1] sm:$0xff]
  %v24 = vld [vmem:[%s1 + $0x8] sm:$0xff]
  %v25 = vmul.f32 %v21, 0.5
  %v26 = vmul.f32 %v22, 0.5
  %v27 = vtanh.pop %v25
  %v28 = vtanh.pop %v26
  %v29 = vmul.f32 %v27, 0.5
  %v30 = vmul.f32 %v28, 0.5
  %v31 = vadd.f32 %v29, 0.5
  %v32 = vadd.f32 %v30, 0.5
  %v33 = vmul.f32 %v31, %v23
  %v34 = vmul.f32 %v32, %v24
  %v35 = vadd.f32 %v31, %v23
  %v36 = vadd.f32 %v32, %v24
  %v37 = vadd.f32 %v33, 0.0
  %v38 = vadd.f32 %v34, 0.0
  %v39 = vadd.f32 %v37, 0.0
  %v40 = vadd.f32 %v38, 0.0
  %v41 = vadd.f32 %v35, 0.0
  %v42 = vadd.f32 %v36, 0.0
  %v43 = vadd.f32 %v41, 0.0
  %v44 = vadd.f32 %v42, 0.0
  %v45 = vld [vmem:[%s2] sm:$0xff]
  %v46 = vld [vmem:[%s2 + $0x8] sm:$0xff]
  %v47 = vadd.f32 %v45, %v39
  %v48 = vadd.f32 %v46, %v40
  %49 = vst [vmem:[%s2] sm:$0xff] %v47
  %50 = vst [vmem:[%s2 + $0x8] sm:$0xff] %v48
  %v51 = vld [vmem:[%s3] sm:$0xff]
  %v52 = vld [vmem:[%s3 + $0x8] sm:$0xff]
  %v53 = vadd.f32 %v51, %v43
  %v54 = vadd.f32 %v52, %v44
  %55 = vst [vmem:[%s3] sm:$0xff] %v53
  %56 = vst [vmem:[%s3 + $0x8] sm:$0xff] %v54
  // Predicated region
  $region14: #{sigmoid_dice_loss.1} parent=0 // pred_check
    _
  $region15: #{sigmoid_dice_loss.1} parent=0 // pred_check_branch
    %58 = sbr.rel (0) target = $region17
  $region16: #{sigmoid_dice_loss.1} parent=0 // pred_region
    _
  $region17: #{sigmoid_dice_loss.1} parent=0 // pred_fallthru
    _
  // Predicated region
  $region18: #{sigmoid_dice_loss.1} parent=0 // pred_check
    _
  $region19: #{sigmoid_dice_loss.1} parent=0 // pred_check_branch
    %60 = sbr.rel (0) target = $region21
  $region20: #{sigmoid_dice_loss.1} parent=0 // pred_region
    _
  $region21: #{sigmoid_dice_loss.1} parent=0 // pred_fallthru
    _
  // Predicated region
  $region22: #{sigmoid_dice_loss.1} parent=0 // pred_check
    _
  $region23: #{sigmoid_dice_loss.1} parent=0 // pred_check_branch
    %62 = sbr.rel (0) target = $region25
  $region24: #{sigmoid_dice_loss.1} parent=0 // pred_region
    _
  $region25: #{sigmoid_dice_loss.1} parent=0 // pred_fallthru
    _
  // Predicated region
  $region26: #{sigmoid_dice_loss.1} parent=0 // pred_check
    _
  $region27: #{sigmoid_dice_loss.1} parent=0 // pred_check_branch
    %64 = sbr.rel (0) target = $region29
  $region28: #{sigmoid_dice_loss.1} parent=0 // pred_region
    _
  $region29: #{sigmoid_dice_loss.1} parent=0 // pred_fallthru
    _

</llo_original>
